<compile_context>
chip_gen: v5e
topology: v5e:2x2
jax: 0.10.0
libtpu: 0.0.40
codegen_flags: <defaults>
</compile_context>

<pallas_src>
import math
import functools

import numpy as np
import jax
import jax.numpy as jnp
from jax import lax
from jax.experimental import pallas as pl
from jax.experimental.pallas import tpu as pltpu


def _to_pair(x):
    return tuple(x) if isinstance(x, (tuple, list)) else (x, x)


def _ceil_div(a, b):
    return -(-a // b)


def _round_up(a, b):
    return _ceil_div(a, b) * b


# ----------------------------- Pallas kernel ------------------------------ #

def _conv2d_rowblock_kernel(*refs, KH, KW, dh, dw, Wp, Cpad, Nblk, has_bias):
    """One grid step == one (batch, output-row-block) window.

    refs (has_bias=True):  x_ref, w_ref, b_ref, o_ref, patch_ref
      x_ref     (1, Cpad, Lblk)      bf16 halo'd row-block window (rows flattened)
      w_ref     (Cout, KH*KW*Cpad)   bf16, column order (kh*KW + kw)*Cpad + c
      b_ref     (Cout, 1)            f32
      o_ref     (1, Cout, Nblk)      f32, Nblk = round_up(TH*Wp, 128) (lane dense)
      patch_ref (KH*KW*Cpad, Nblk)   bf16 im2col scratch
    """
    if has_bias:
        x_ref, w_ref, b_ref, o_ref, patch_ref = refs
    else:
        x_ref, w_ref, o_ref, patch_ref = refs
        b_ref = None

    shift = (KW - 1) * dw
    for kh in range(KH):
        # One lane-load per kernel row; the KW lane-shifted taps are produced
        # from the resident value (cuts VMEM read traffic by ~KW x).
        row = x_ref[0, :, pl.ds(kh * dh * Wp, Nblk + shift)]       # (Cpad, Nblk+shift)
        for kw in range(KW):
            tap = (kh * KW + kw) * Cpad                            # 8-sublane aligned
            patch_ref[pl.ds(tap, Cpad), :] = row[:, kw * dw:kw * dw + Nblk]

    # Single MXU matmul over the whole KH*KW*Cpad contraction (bf16 x bf16,
    # f32 accumulate).  Channels-first orientation -> lane-dense output store.
    acc = jnp.dot(w_ref[...], patch_ref[...],
                  preferred_element_type=jnp.float32)
    if has_bias:
        acc = acc + b_ref[...]                                     # (Cout,1) lane-bcast
    o_ref[0] = jnp.maximum(acc, 0.0).astype(o_ref.dtype)           # post-act ReLU


# ------------------------------- wrapper ----------------------------------- #

class Conv2dPallas:
    """JAX/Pallas equivalent of padertorch Conv2d(_Conv) with default options
    (norm=None, gated=False, pre_activation=False, activation='relu',
    dropout inactive, stride=1)."""

    def __init__(self, in_channels, out_channels, kernel_size, pad_side='both',
                 dilation=1, stride=1, bias=True, key=None):
        if key is None:
            key = jax.random.PRNGKey(0)
        self.in_channels = in_channels
        self.out_channels = out_channels
        self.pad_side = _to_pair(pad_side)
        self.kernel_size = _to_pair(kernel_size)
        self.dilation = _to_pair(dilation)
        self.stride = _to_pair(stride)
        assert self.stride == (1, 1), "kernel supports stride=1"
        self.has_bias = bool(bias)

        kh, kw = self.kernel_size
        # xavier_uniform_: bound = sqrt(6 / (fan_in + fan_out))
        fan_in = in_channels * kh * kw
        fan_out = out_channels * kh * kw
        bound = math.sqrt(6.0 / (fan_in + fan_out))
        # torch layout (Cout, Cin, KH, KW), kept in f32 as the "true" parameter
        self.weight = jax.random.uniform(
            key, (out_channels, in_channels, kh, kw),
            minval=-bound, maxval=bound, dtype=jnp.float32)

        # Pad Cin up to a multiple of 8 so every im2col tap store hits a full
        # 8-sublane block; matching weight columns are zero (exact result).
        self.cin_pad = _round_up(in_channels, 8)
        w_khwc = jnp.transpose(self.weight, (0, 2, 3, 1))           # (Cout,KH,KW,Cin)
        w_khwc = jnp.pad(
            w_khwc, ((0, 0), (0, 0), (0, 0), (0, self.cin_pad - in_channels)))
        # bf16 weights (+ bf16 patch) with f32 accumulation -> full-rate MXU
        self.weight_flat = w_khwc.reshape(
            out_channels, kh * kw * self.cin_pad).astype(jnp.bfloat16)
        self.bias = (jnp.zeros((out_channels, 1), jnp.float32)
                     if self.has_bias else None)

    # ---- padding exactly as _Conv.pad_or_trim (stride=1, non-transpose) ---- #
    def _pad_amounts(self, spatial):
        pads = []
        for side, L, k, d, s in zip(self.pad_side, spatial,
                                    self.kernel_size, self.dilation, self.stride):
            size = d * (k - 1) - (L - 1) % s
            if side is None or size < 1:
                pads.append((0, 0))
            elif side == 'front':
                pads.append((size, 0))
            elif side == 'both':
                pads.append((size // 2, math.ceil(size / 2)))
            elif side == 'end':
                pads.append((0, size))
            else:
                raise ValueError(f'pad side {side} unknown')
        return pads

    def get_out_lengths(self, in_lengths):
        out = np.array(in_lengths)
        if self.pad_side[-1] is None:
            out = out - self.dilation[-1] * (self.kernel_size[-1] - 1)
        return np.ceil(out / self.stride[-1]).astype(np.int64)

    # ---- generation-gated VMEM budget & row-block plan --------------------- #
    @staticmethod
    def _vmem_limit_bytes():
        # ~48 MiB on v7x (64 MiB physical), ~96 MiB on v5e/v6e (128 MiB).
        try:
            cap = pltpu.get_tpu_info().vmem_capacity_bytes
        except Exception:
            cap = 64 * 1024 * 1024
        return int(min(cap * 3 // 4, 100 * 1024 * 1024))

    def _plan_row_blocks(self, B, Ho, Wp, vmem_limit):
        kh, kw = self.kernel_size
        dh, dw = self.dilation
        kdim = kh * kw * self.cin_pad
        cout = self.out_channels

        def step_bytes(th):
            nblk = _round_up(th * Wp, 128)
            lblk = (kh - 1) * dh * Wp + (kw - 1) * dw + nblk
            return (kdim * nblk * 2                 # bf16 im2col patch scratch
                    + 2 * self.cin_pad * lblk * 2   # double-buffered bf16 window
                    + 2 * cout * nblk * 4)          # double-buffered f32 out block

        # Enough grid steps that both v7x TensorCores see >=2-3 pipelined steps.
        target_steps = 6
        R = min(Ho, max(1, _ceil_div(target_steps, B)))
        TH = _ceil_div(Ho, R)
        budget = max(1 << 20, vmem_limit // 2)
        while TH > 1 and step_bytes(TH) > budget:
            TH = _ceil_div(TH, 2)
        # TODO(synk): if step_bytes(1) still exceeds `budget`, tile W as well.
        R = _ceil_div(Ho, TH)
        return TH, R, _round_up(TH * Wp, 128)

    # ------------------------------ forward --------------------------------- #
    def __call__(self, x, seq_len=None):
        # x: NCHW float32
        kh, kw = self.kernel_size
        dh, dw = self.dilation
        cout = self.out_channels
        cpad = self.cin_pad
        B, cin, H, W = x.shape
        assert cin == self.in_channels

        (fh, eh), (fw, ew) = self._pad_amounts((H, W))
        Hp, Wp = H + fh + eh, W + fw + ew
        Ho = Hp - dh * (kh - 1)
        Wo = Wp - dw * (kw - 1)

        vmem_limit = self._vmem_limit_bytes()
        TH, R, Nblk = self._plan_row_blocks(B, Ho, Wp, vmem_limit)
        Lblk = (kh - 1) * dh * Wp + (kw - 1) * dw + Nblk   # per-window flat length
        rows_needed = _ceil_div((R - 1) * TH * Wp + Lblk, Wp)
        extra_rows = max(0, rows_needed - Hp)              # tail slack rows

        # Single fused pad: channel pad to cpad, spatial pad, tail rows; bf16.
        xp = jnp.pad(x.astype(jnp.bfloat16),
                     ((0, 0), (0, cpad - cin), (fh, eh + extra_rows), (fw, ew)))
        x_flat = xp.reshape(B, cpad, -1)                   # free, contiguous reshape
        # Halo'd row-block windows (overlap = dh*(kh-1) rows), one per grid step.
        x_win = jnp.stack(
            [lax.slice_in_dim(x_flat, r * TH * Wp, r * TH * Wp + Lblk, axis=2)
             for r in range(R)], axis=1)
        x_win = x_win.reshape(B * R, cpad, Lblk)

        kdim = kh * kw * cpad
        kernel = functools.partial(
            _conv2d_rowblock_kernel, KH=kh, KW=kw, dh=dh, dw=dw,
            Wp=Wp, Cpad=cpad, Nblk=Nblk, has_bias=self.has_bias)

        in_specs = [
            pl.BlockSpec((1, cpad, Lblk), lambda i: (i, 0, 0)),
            pl.BlockSpec((cout, kdim), lambda i: (0, 0)),
        ]
        operands = [x_win, self.weight_flat]
        if self.has_bias:
            in_specs.append(pl.BlockSpec((cout, 1), lambda i: (0, 0)))
            operands.append(self.bias)

        steps = B * R
        cost = pl.CostEstimate(
            flops=2 * steps * cout * kdim * Nblk,
            transcendentals=0,
            bytes_accessed=(steps * cpad * Lblk * 2 + cout * kdim * 2
                            + (cout * 4 if self.has_bias else 0)
                            + steps * cout * Nblk * 4))

        y = pl.pallas_call(
            kernel,
            out_shape=jax.ShapeDtypeStruct((steps, cout, Nblk), jnp.float32),
            grid=(steps,),
            in_specs=in_specs,
            out_specs=pl.BlockSpec((1, cout, Nblk), lambda i: (i, 0, 0)),
            scratch_shapes=[pltpu.VMEM((kdim, Nblk), jnp.bfloat16)],
            compiler_params=pltpu.CompilerParams(
                dimension_semantics=("parallel",),
                vmem_limit_bytes=vmem_limit),
            cost_estimate=cost,
        )(*operands)

        # (B*R, Cout, Nblk) -> (B, Cout, Ho, Wo): drop lane padding, un-block
        # the rows, crop the conv wrap-around columns and tail rows.
        y = y.reshape(B, R, cout, Nblk)[:, :, :, :TH * Wp]
        y = y.reshape(B, R, cout, TH, Wp)
        y = jnp.transpose(y, (0, 2, 1, 3, 4)).reshape(B, cout, R * TH, Wp)
        y = y[:, :, :Ho, :Wo]

        if seq_len is not None:
            seq_len = self.get_out_lengths(seq_len)
        return y, seq_len


# ------------------------------- demo / check ------------------------------ #

if __name__ == "__main__":
    key = jax.random.PRNGKey(0)
    kx, kparam = jax.random.split(key)

    B, Cin, H, W = 2, 4, 16, 16
    Cout, K = 8, 3

    x = jax.random.normal(kx, (B, Cin, H, W), dtype=jnp.float32)
    seq_len = np.array([16, 12])

    conv = Conv2dPallas(Cin, Cout, K, key=kparam)
    y, out_len = conv(x, seq_len=seq_len)
    y = jax.block_until_ready(y)

    # Reference: lax conv on the identically padded input with the same bf16
    # rounding of inputs/weights and f32 accumulation, + bias + relu.
    (fh, eh), (fw, ew) = conv._pad_amounts((H, W))
    x_pad = jnp.pad(x, ((0, 0), (0, 0), (fh, eh), (fw, ew)))
    y_ref = lax.conv_general_dilated(
        x_pad.astype(jnp.bfloat16), conv.weight.astype(jnp.bfloat16),
        window_strides=(1, 1), padding='VALID',
        rhs_dilation=conv.dilation,
        dimension_numbers=('NCHW', 'OIHW', 'NCHW'),
        preferred_element_type=jnp.float32)
    if conv.has_bias:
        y_ref = y_ref + conv.bias.reshape(1, Cout, 1, 1)
    y_ref = jnp.maximum(y_ref, 0.0)

    assert y.shape == (B, Cout, H, W), y.shape
    assert y.dtype == jnp.float32, y.dtype
    assert np.array_equal(out_len, seq_len), (out_len, seq_len)
    err = float(jnp.max(jnp.abs(y - y_ref)))
    assert jnp.allclose(y, y_ref, atol=2e-2, rtol=2e-2), err

    print("KERNEL_OK")
</pallas_src>

<mosaic_0001>
module attributes {stable_mosaic.version = 11 : i64} {
  func.func @_conv2d_rowblock_kernel(%arg0: i32, %arg1: memref<1x8x166xbf16, #tpu.memory_space<vmem>>, %arg2: memref<8x72xbf16, #tpu.memory_space<vmem>>, %arg3: memref<8x1xf32, #tpu.memory_space<vmem>>, %arg4: memref<1x8x128xf32, #tpu.memory_space<vmem>>, %arg5: memref<72x128xbf16, #tpu.memory_space<vmem>>) attributes {dimension_semantics = [#tpu.dimension_semantics<parallel>], iteration_bounds = array<i64: 6>, scalar_prefetch = 0 : i64, scratch_operands = 1 : i64, tpu.core_type = #tpu.core_type<tc>, window_params = [{transform_indices = @transform_0, window_bounds = array<i64: 1, 8, 166>}, {pipeline_mode = #tpu.pipeline_mode<synchronous>, transform_indices = @transform_1, window_bounds = array<i64: 8, 72>}, {pipeline_mode = #tpu.pipeline_mode<synchronous>, transform_indices = @transform_2, window_bounds = array<i64: 8, 1>}, {transform_indices = @transform_3, window_bounds = array<i64: 1, 8, 128>}]} {
    %c0 = arith.constant 0 : index
    %c0_0 = arith.constant 0 : index
    %c0_1 = arith.constant 0 : index
    %0 = vector.load %arg1[%c0, %c0_0, %c0_1] : memref<1x8x166xbf16, #tpu.memory_space<vmem>>, vector<1x8x130xbf16>
    %1 = vector.shape_cast %0 : vector<1x8x130xbf16> to vector<8x130xbf16>
    %2 = vector.extract_strided_slice %1 {offsets = [0, 0], sizes = [8, 128], strides = [1, 1]} : vector<8x130xbf16> to vector<8x128xbf16>
    %c0_2 = arith.constant 0 : index
    %c0_3 = arith.constant 0 : index
    %3 = vector.load %arg5[%c0_2, %c0_3] : memref<72x128xbf16, #tpu.memory_space<vmem>>, vector<8x128xbf16>
    tpu.vector_store %arg5[%c0_2, %c0_3], %2 {strides = array<i32>} : memref<72x128xbf16, #tpu.memory_space<vmem>>, vector<8x128xbf16>,
    %4 = vector.extract_strided_slice %1 {offsets = [0, 1], sizes = [8, 128], strides = [1, 1]} : vector<8x130xbf16> to vector<8x128xbf16>
    %c8 = arith.constant 8 : index
    %c0_4 = arith.constant 0 : index
    %5 = vector.load %arg5[%c8, %c0_4] : memref<72x128xbf16, #tpu.memory_space<vmem>>, vector<8x128xbf16>
    tpu.vector_store %arg5[%c8, %c0_4], %4 {strides = array<i32>} : memref<72x128xbf16, #tpu.memory_space<vmem>>, vector<8x128xbf16>,
    %6 = vector.extract_strided_slice %1 {offsets = [0, 2], sizes = [8, 128], strides = [1, 1]} : vector<8x130xbf16> to vector<8x128xbf16>
    %c16 = arith.constant 16 : index
    %c0_5 = arith.constant 0 : index
    %7 = vector.load %arg5[%c16, %c0_5] : memref<72x128xbf16, #tpu.memory_space<vmem>>, vector<8x128xbf16>
    tpu.vector_store %arg5[%c16, %c0_5], %6 {strides = array<i32>} : memref<72x128xbf16, #tpu.memory_space<vmem>>, vector<8x128xbf16>,
    %c0_6 = arith.constant 0 : index
    %c0_7 = arith.constant 0 : index
    %c18 = arith.constant 18 : index
    %8 = vector.load %arg1[%c0_6, %c0_7, %c18] : memref<1x8x166xbf16, #tpu.memory_space<vmem>>, vector<1x8x130xbf16>
    %9 = vector.shape_cast %8 : vector<1x8x130xbf16> to vector<8x130xbf16>
    %10 = vector.extract_strided_slice %9 {offsets = [0, 0], sizes = [8, 128], strides = [1, 1]} : vector<8x130xbf16> to vector<8x128xbf16>
    %c24 = arith.constant 24 : index
    %c0_8 = arith.constant 0 : index
    %11 = vector.load %arg5[%c24, %c0_8] : memref<72x128xbf16, #tpu.memory_space<vmem>>, vector<8x128xbf16>
    tpu.vector_store %arg5[%c24, %c0_8], %10 {strides = array<i32>} : memref<72x128xbf16, #tpu.memory_space<vmem>>, vector<8x128xbf16>,
    %12 = vector.extract_strided_slice %9 {offsets = [0, 1], sizes = [8, 128], strides = [1, 1]} : vector<8x130xbf16> to vector<8x128xbf16>
    %c32 = arith.constant 32 : index
    %c0_9 = arith.constant 0 : index
    %13 = vector.load %arg5[%c32, %c0_9] : memref<72x128xbf16, #tpu.memory_space<vmem>>, vector<8x128xbf16>
    tpu.vector_store %arg5[%c32, %c0_9], %12 {strides = array<i32>} : memref<72x128xbf16, #tpu.memory_space<vmem>>, vector<8x128xbf16>,
    %14 = vector.extract_strided_slice %9 {offsets = [0, 2], sizes = [8, 128], strides = [1, 1]} : vector<8x130xbf16> to vector<8x128xbf16>
    %c40 = arith.constant 40 : index
    %c0_10 = arith.constant 0 : index
    %15 = vector.load %arg5[%c40, %c0_10] : memref<72x128xbf16, #tpu.memory_space<vmem>>, vector<8x128xbf16>
    tpu.vector_store %arg5[%c40, %c0_10], %14 {strides = array<i32>} : memref<72x128xbf16, #tpu.memory_space<vmem>>, vector<8x128xbf16>,
    %c0_11 = arith.constant 0 : index
    %c0_12 = arith.constant 0 : index
    %c36 = arith.constant 36 : index
    %16 = vector.load %arg1[%c0_11, %c0_12, %c36] : memref<1x8x166xbf16, #tpu.memory_space<vmem>>, vector<1x8x130xbf16>
    %17 = vector.shape_cast %16 : vector<1x8x130xbf16> to vector<8x130xbf16>
    %18 = vector.extract_strided_slice %17 {offsets = [0, 0], sizes = [8, 128], strides = [1, 1]} : vector<8x130xbf16> to vector<8x128xbf16>
    %c48 = arith.constant 48 : index
    %c0_13 = arith.constant 0 : index
    %19 = vector.load %arg5[%c48, %c0_13] : memref<72x128xbf16, #tpu.memory_space<vmem>>, vector<8x128xbf16>
    tpu.vector_store %arg5[%c48, %c0_13], %18 {strides = array<i32>} : memref<72x128xbf16, #tpu.memory_space<vmem>>, vector<8x128xbf16>,
    %20 = vector.extract_strided_slice %17 {offsets = [0, 1], sizes = [8, 128], strides = [1, 1]} : vector<8x130xbf16> to vector<8x128xbf16>
    %c56 = arith.constant 56 : index
    %c0_14 = arith.constant 0 : index
    %21 = vector.load %arg5[%c56, %c0_14] : memref<72x128xbf16, #tpu.memory_space<vmem>>, vector<8x128xbf16>
    tpu.vector_store %arg5[%c56, %c0_14], %20 {strides = array<i32>} : memref<72x128xbf16, #tpu.memory_space<vmem>>, vector<8x128xbf16>,
    %22 = vector.extract_strided_slice %17 {offsets = [0, 2], sizes = [8, 128], strides = [1, 1]} : vector<8x130xbf16> to vector<8x128xbf16>
    %c64 = arith.constant 64 : index
    %c0_15 = arith.constant 0 : index
    %23 = vector.load %arg5[%c64, %c0_15] : memref<72x128xbf16, #tpu.memory_space<vmem>>, vector<8x128xbf16>
    tpu.vector_store %arg5[%c64, %c0_15], %22 {strides = array<i32>} : memref<72x128xbf16, #tpu.memory_space<vmem>>, vector<8x128xbf16>,
    %c0_16 = arith.constant 0 : index
    %c0_17 = arith.constant 0 : index
    %24 = vector.load %arg2[%c0_16, %c0_17] : memref<8x72xbf16, #tpu.memory_space<vmem>>, vector<8x72xbf16>
    %c0_18 = arith.constant 0 : index
    %c0_19 = arith.constant 0 : index
    %25 = vector.load %arg5[%c0_18, %c0_19] : memref<72x128xbf16, #tpu.memory_space<vmem>>, vector<72x128xbf16>
    %cst = arith.constant dense<0.000000e+00> : vector<8x128xf32>
    %26 = tpu.matmul %24, %25, %cst {dimension_numbers = #tpu.dot_dimension_numbers<[1], [0], [0], [1], [0, 0, 1, 1], [], []>} : vector<8x72xbf16>, vector<72x128xbf16>, vector<8x128xf32> -> vector<8x128xf32>
    %c0_20 = arith.constant 0 : index
    %c0_21 = arith.constant 0 : index
    %27 = vector.load %arg3[%c0_20, %c0_21] : memref<8x1xf32, #tpu.memory_space<vmem>>, vector<8x1xf32>
    %28 = vector.broadcast %27 : vector<8x1xf32> to vector<8x128xf32>
    %29 = arith.addf %26, %28 : vector<8x128xf32>
    %cst_22 = arith.constant 0.000000e+00 : f32
    %30 = vector.broadcast %cst_22 : f32 to vector<8x128xf32>
    %31 = arith.maximumf %29, %30 : vector<8x128xf32>
    %c0_23 = arith.constant 0 : index
    %c0_24 = arith.constant 0 : index
    %c0_25 = arith.constant 0 : index
    %32 = vector.load %arg4[%c0_23, %c0_24, %c0_25] : memref<1x8x128xf32, #tpu.memory_space<vmem>>, vector<1x8x128xf32>
    %33 = vector.shape_cast %32 : vector<1x8x128xf32> to vector<8x128xf32>
    %34 = vector.shape_cast %31 : vector<8x128xf32> to vector<1x8x128xf32>
    tpu.vector_store %arg4[%c0_23, %c0_24, %c0_25], %34 {strides = array<i32>} : memref<1x8x128xf32, #tpu.memory_space<vmem>>, vector<1x8x128xf32>,
    return
  }
  func.func @transform_0(%arg0: i32) -> (i32, i32, i32) {
    %c0_i32 = arith.constant 0 : i32
    %c0_i32_0 = arith.constant 0 : i32
    %c0_i32_1 = arith.constant 0 : i32
    return %arg0, %c0_i32, %c0_i32_0 : i32, i32, i32
  }
  func.func @transform_1(%arg0: i32) -> (i32, i32) {
    %c0_i32 = arith.constant 0 : i32
    %c0_i32_0 = arith.constant 0 : i32
    %c0_i32_1 = arith.constant 0 : i32
    return %c0_i32, %c0_i32_0 : i32, i32
  }
  func.func @transform_2(%arg0: i32) -> (i32, i32) {
    %c0_i32 = arith.constant 0 : i32
    %c0_i32_0 = arith.constant 0 : i32
    %c0_i32_1 = arith.constant 0 : i32
    return %c0_i32, %c0_i32_0 : i32, i32
  }
  func.func @transform_3(%arg0: i32) -> (i32, i32, i32) {
    %c0_i32 = arith.constant 0 : i32
    %c0_i32_0 = arith.constant 0 : i32
    %c0_i32_1 = arith.constant 0 : i32
    return %arg0, %c0_i32, %c0_i32_0 : i32, i32, i32
  }
}

</mosaic_0001>

<llo_original>
// kernel: tpu_custom_call.1
$region0: #{tpu_custom_call.1}
  #allocation0 [shape = 'u32[]', space=smem, size = 0x4, offset = 0x4, fixed_abs, tag = 'smem constant byte address 0x4 - core index']
  #allocation1 [shape = 'u32[72,128]{1,0:T(1,128)}', space=vmem, size = 0x9000, scoped, tag = 'internal scratch']
  #allocation2 [shape = 'bf16[72,128]{1,0:T(8,128)(2,1)}', space=vmem, size = 0x4800, scoped, tag = 'scratch operand']
  %s0 = inlined_call_operand.hbm [shape: bf16[6,8,166], index: 0, kind: input, shape index: {}]
  %s1 = inlined_call_operand.vmem [shape: bf16[8,72], index: 1, kind: input, shape index: {}]
  %s2 = inlined_call_operand.vmem [shape: f32[8,1], index: 2, kind: input, shape index: {}]
  %s3 = inlined_call_operand.hbm [shape: f32[6,8,128], index: 3, kind: output, shape index: {}]
  %s4 = sld [smem:[#allocation0]]
  $region49: #{tpu_custom_call.1} parent=0
    _
  %s6 = ssub.s32 1, %s4
  %s7 = scalar_select 0, %s6, %s4
  $region1: #{tpu_custom_call.1} parent=0
    #allocation3 [shape = 'u8[8192]{0}', space=vmem, size = 0x2000, scoped, tag = 'input window, operand 0']
    #allocation4 [shape = 's32[2]{0}', space=sflag, size = 0x8, scoped, tag = 'scoped memory for tpu_custom_call.1']
    #allocation5 [shape = 's32[2]{0}', space=sflag, size = 0x8, scoped, tag = 'scoped memory for tpu_custom_call.1']
    #allocation6 [shape = 'u8[8192]{0}', space=vmem, size = 0x2000, scoped, tag = 'output window, operand 0']
    %8 = vsyncpa [#allocation4], 0
    %s9 = scalar_lea.sflag [#allocation4], 1
    %10 = vsyncpa %s9, 0
    %11 = vsyncpa [#allocation5], 0
    %s12 = scalar_lea.sflag [#allocation5], 1
    %13 = vsyncpa %s12, 0
    loop: start=0, step=1, limit=8
    $region2: #{tpu_custom_call.1} parent=1 // loop_pre_header
      _
    $region3: #{tpu_custom_call.1} parent=1 // loop_header
      %s15 = sphi 0, %s19
      %p16 = scmp.ge.s32.totalorder %s15, 8
      %s25 = sphi 0, %s27
      %s28 = sphi 0, %s25
      %s29 = sphi 0, %s28
      %s45 = sphi 0, %s29
      %s49 = sphi 0, %s49
      %s51 = sphi 0, %s49
      %s52 = sphi 0, %s51
      %s66 = sphi 0, %s52
      %s70 = sphi 0, %s70
      %s72 = sphi 0, %s70
      %s73 = sphi 0, %s72
      %s87 = sphi 0, %s73
      %s93 = sphi 0, %s95
      %s96 = sphi 0, %s93
      %s97 = sphi 0, %s96
      %s113 = sphi 0, %s97
    $region4: #{tpu_custom_call.1} parent=1 // loop_header_branch
      %18 = sbr.rel (%p16) target = $region8
    $region5: #{tpu_custom_call.1} parent=1 // loop_body
      %s20 = ssub.s32 %s15, 1
      %s21 = ssub.s32 %s15, 2
      %s22 = sadd.s32 %s15, 1
      %s23 = ssub.s32 %s15, %s22
      %p24 = scmp.eq.s32.totalorder %s23, 0
      %s26 = sadd.s32 %s25, 1
      %s27 = scalar_select %p24, %s25, %s26
      %p30 = pneg %p24
      %p31 = scmp.eq.s32.totalorder %s15, 5
      %p32 = por %p30, %p31
      %p33 = scmp.ne.s32.totalorder %s25, %s28
      %p34 = scmp.eq.s32.totalorder %s15, 0
      %p35 = por %p33, %p34
      %p36 = scmp.ne.s32.totalorder %s25, %s28
      %p37 = scmp.eq.s32.totalorder %s20, 5
      %p38 = por %p36, %p37
      %p39 = scmp.ne.s32.totalorder %s28, %s29
      %p40 = scmp.eq.s32.totalorder %s20, 0
      %p41 = por %p39, %p40
      %p42 = scmp.ne.s32.totalorder %s28, %s29
      %p43 = scmp.eq.s32.totalorder %s21, 5
      %p44 = por %p42, %p43
      %p46 = scmp.ne.s32.totalorder %s29, %s45
      %p47 = scmp.eq.s32.totalorder %s21, 0
      %p48 = por %p46, %p47
      %s50 = sadd.s32 %s49, 1
      %p53 = scmp.eq.s32.totalorder %s15, 5
      %p54 = scmp.ne.s32.totalorder %s49, %s51
      %p55 = scmp.eq.s32.totalorder %s15, 0
      %p56 = por %p54, %p55
      %p57 = scmp.ne.s32.totalorder %s49, %s51
      %p58 = scmp.eq.s32.totalorder %s20, 5
      %p59 = por %p57, %p58
      %p60 = scmp.ne.s32.totalorder %s51, %s52
      %p61 = scmp.eq.s32.totalorder %s20, 0
      %p62 = por %p60, %p61
      %p63 = scmp.ne.s32.totalorder %s51, %s52
      %p64 = scmp.eq.s32.totalorder %s21, 5
      %p65 = por %p63, %p64
      %p67 = scmp.ne.s32.totalorder %s52, %s66
      %p68 = scmp.eq.s32.totalorder %s21, 0
      %p69 = por %p67, %p68
      %s71 = sadd.s32 %s70, 1
      %p74 = scmp.eq.s32.totalorder %s15, 5
      %p75 = scmp.ne.s32.totalorder %s70, %s72
      %p76 = scmp.eq.s32.totalorder %s15, 0
      %p77 = por %p75, %p76
      %p78 = scmp.ne.s32.totalorder %s70, %s72
      %p79 = scmp.eq.s32.totalorder %s20, 5
      %p80 = por %p78, %p79
      %p81 = scmp.ne.s32.totalorder %s72, %s73
      %p82 = scmp.eq.s32.totalorder %s20, 0
      %p83 = por %p81, %p82
      %p84 = scmp.ne.s32.totalorder %s72, %s73
      %p85 = scmp.eq.s32.totalorder %s21, 5
      %p86 = por %p84, %p85
      %p88 = scmp.ne.s32.totalorder %s73, %s87
      %p89 = scmp.eq.s32.totalorder %s21, 0
      %p90 = por %p88, %p89
      %s91 = ssub.s32 %s15, %s22
      %p92 = scmp.eq.s32.totalorder %s91, 0
      %s94 = sadd.s32 %s93, 1
      %s95 = scalar_select %p92, %s93, %s94
      %p98 = pneg %p92
      %p99 = scmp.eq.s32.totalorder %s15, 5
      %p100 = por %p98, %p99
      %p101 = scmp.ne.s32.totalorder %s93, %s96
      %p102 = scmp.eq.s32.totalorder %s15, 0
      %p103 = por %p101, %p102
      %p104 = scmp.ne.s32.totalorder %s93, %s96
      %p105 = scmp.eq.s32.totalorder %s20, 5
      %p106 = por %p104, %p105
      %p107 = scmp.ne.s32.totalorder %s96, %s97
      %p108 = scmp.eq.s32.totalorder %s20, 0
      %p109 = por %p107, %p108
      %p110 = scmp.ne.s32.totalorder %s96, %s97
      %p111 = scmp.eq.s32.totalorder %s21, 5
      %p112 = por %p110, %p111
      %p114 = scmp.ne.s32.totalorder %s97, %s113
      %p115 = scmp.eq.s32.totalorder %s21, 0
      %p116 = por %p114, %p115
      %p117 = scmp.le.s32.totalorder 1, %s15
      %p118 = scmp.lt.s32.totalorder %s15, 7
      %p119 = pnand %p117, %p118
      %p120 = pneg %p119
      // Predicated region
      $region9: #{tpu_custom_call.1} parent=5 // pred_check
        _
      $region10: #{tpu_custom_call.1} parent=5 // pred_check_branch
        %122 = sbr.rel (%p119) target = $region12
      $region11: #{tpu_custom_call.1} parent=5 // pred_region
        %s123 = ssub.s32 %s15, 1
        // Predicated region
        $region13: #{tpu_custom_call.1} parent=11 // pred_check
          %p124 = pneg %p62
        $region14: #{tpu_custom_call.1} parent=11 // pred_check_branch
          %126 = sbr.rel (%p124) target = $region16
        $region15: #{tpu_custom_call.1} parent=11 // pred_region
          _
        $region16: #{tpu_custom_call.1} parent=11 // pred_fallthru
          _
        // Predicated region
        $region17: #{tpu_custom_call.1} parent=11 // pred_check
          %p127 = pneg %p83
        $region18: #{tpu_custom_call.1} parent=11 // pred_check_branch
          %129 = sbr.rel (%p127) target = $region20
        $region19: #{tpu_custom_call.1} parent=11 // pred_region
          _
        $region20: #{tpu_custom_call.1} parent=11 // pred_fallthru
          _
      $region12: #{tpu_custom_call.1} parent=5 // pred_fallthru
        _
      %p130 = scmp.lt.s32.totalorder %s15, 6
      // Predicated region
      $region21: #{tpu_custom_call.1} parent=5 // pred_check
        %p131 = pneg %p130
      $region22: #{tpu_custom_call.1} parent=5 // pred_check_branch
        %133 = sbr.rel (%p131) target = $region24
      $region23: #{tpu_custom_call.1} parent=5 // pred_region
        // Predicated region
        $region25: #{tpu_custom_call.1} parent=23 // pred_check
          %p134 = pneg %p35
        $region26: #{tpu_custom_call.1} parent=23 // pred_check_branch
          %136 = sbr.rel (%p134) target = $region28
        $region27: #{tpu_custom_call.1} parent=23 // pred_region
          %s137 = sand.u32 %s25, 1
          %s138 = scalar_lea.sflag [#allocation4], %s137
          %s139 = sand.u32 %s25, 1
          %s140 = smul.addr %s139, 8
          %s141 = scalar_lea.vmem [#allocation3], %s140
          %143 = vsyncadd %s138, 0
          %s144 = smul.addr %s15, 2
          %s145 = smul.addr %s144, 4
          %s146 = scalar_lea.hbm %s0, %s145
          %s148 = sshll.u32 %s146, 4
          %s149 = int_to_ptr.hbm [resolvable:$true] %s148
          %s150 = sshll.u32 %s141, 4
          %s151 = int_to_ptr.vmem [resolvable:$true] %s150
          %153 = dma.hbm_to_vmem [thread:$0]  %s149, 128, %s151, %s138
        $region28: #{tpu_custom_call.1} parent=23 // pred_fallthru
          _
      $region24: #{tpu_custom_call.1} parent=5 // pred_fallthru
        _
      %p154 = scmp.le.s32.totalorder 1, %s15
      %p155 = scmp.lt.s32.totalorder %s15, 7
      %p156 = pnand %p154, %p155
      %p157 = pneg %p156
      // Predicated region
      $region29: #{tpu_custom_call.1} parent=5 // pred_check
        _
      $region30: #{tpu_custom_call.1} parent=5 // pred_check_branch
        %159 = sbr.rel (%p156) target = $region32
      $region31: #{tpu_custom_call.1} parent=5 // pred_region
        %s160 = ssub.s32 %s15, 1
        %s161 = sand.u32 %s28, 1
        %s162 = scalar_lea.sflag [#allocation4], %s161
        %s163 = sand.u32 %s28, 1
        %s164 = smul.addr %s163, 8
        %s165 = scalar_lea.vmem [#allocation3], %s164
        // Predicated region
        $region33: #{tpu_custom_call.1} parent=31 // pred_check
          %p166 = pneg %p41
        $region34: #{tpu_custom_call.1} parent=31 // pred_check_branch
          %168 = sbr.rel (%p166) target = $region36
        $region35: #{tpu_custom_call.1} parent=31 // pred_region
          %170 = dma.done %s162, 128
        $region36: #{tpu_custom_call.1} parent=31 // pred_fallthru
          _
        %s171 = sand.u32 %s28, 1
        %s172 = scalar_lea.sflag [#allocation4], %s171
        %s173 = sand.u32 %s28, 1
        %s174 = smul.addr %s173, 8
        %s175 = scalar_lea.vmem [#allocation3], %s174
        %p176 = pneg %p41
        %p177 = pneg %p38
        %p178 = pneg %p62
        %p179 = pneg %p59
        %p180 = pneg %p83
        %p181 = pneg %p80
        %p182 = pneg %p109
        %p183 = pneg %p106
        %s184 = sand.u32 %s96, 1
        %s185 = scalar_lea.sflag [#allocation5], %s184
        %s186 = sand.u32 %s96, 1
        %s187 = smul.addr %s186, 8
        %s188 = scalar_lea.vmem [#allocation6], %s187
        %v190 = vld [vmem:[%s165] sm:$0xff]
        %191 = vst [vmem:[#allocation2] sm:$0xf] %v190
        %193 = vrot.lane.b32.xlu0 %v190, 127
        %v194 = vpop.permute.xlu0 %193
        %v195 = vrot.slane %v194, 4
        %vm196 = vcmask 1039360
        %v197 = vsel %vm196, %v194, %v195
        %199 = vst [vmem:[#allocation2 + $0x4] sm:$0xf] %v197
        %200 = vrot.lane.b32.xlu0 %v190, 126
        %v201 = vpop.permute.xlu0 %200
        %v202 = vrot.slane %v201, 4
        %vm203 = vcmask 1031168
        %v204 = vsel %vm203, %v201, %v202
        %206 = vst [vmem:[#allocation2 + $0x8] sm:$0xf] %v204
        %v207 = vld [vmem:[%s165] sm:$0xff]
        %209 = vrot.lane.b32.xlu0 %v207, 110
        %v210 = vpop.permute.xlu0 %209
        %v211 = vrot.slane %v210, 4
        %vm212 = vcmask 900096
        %v213 = vsel %vm212, %v210, %v211
        %215 = vst [vmem:[#allocation2 + $0xc] sm:$0xf] %v213
        %216 = vrot.lane.b32.xlu0 %v207, 109
        %v217 = vpop.permute.xlu0 %216
        %v218 = vrot.slane %v217, 4
        %vm219 = vcmask 891904
        %v220 = vsel %vm219, %v217, %v218
        %222 = vst [vmem:[#allocation2 + $0x10] sm:$0xf] %v220
        %223 = vrot.lane.b32.xlu0 %v207, 108
        %v224 = vpop.permute.xlu0 %223
        %v225 = vrot.slane %v224, 4
        %vm226 = vcmask 883712
        %v227 = vsel %vm226, %v224, %v225
        %229 = vst [vmem:[#allocation2 + $0x14] sm:$0xf] %v227
        %v230 = vld [vmem:[%s165] sm:$0xff]
        %232 = vrot.lane.b32.xlu0 %v230, 92
        %v233 = vpop.permute.xlu0 %232
        %v234 = vrot.slane %v233, 4
        %vm235 = vcmask 752640
        %v236 = vsel %vm235, %v233, %v234
        %238 = vst [vmem:[#allocation2 + $0x18] sm:$0xf] %v236
        %239 = vrot.lane.b32.xlu0 %v230, 91
        %v240 = vpop.permute.xlu0 %239
        %v241 = vrot.slane %v240, 4
        %vm242 = vcmask 744448
        %v243 = vsel %vm242, %v240, %v241
        %245 = vst [vmem:[#allocation2 + $0x1c] sm:$0xf] %v243
        %246 = vrot.lane.b32.xlu0 %v230, 90
        %v247 = vpop.permute.xlu0 %246
        %v248 = vrot.slane %v247, 4
        %vm249 = vcmask 736256
        %v250 = vsel %vm249, %v247, %v248
        %252 = vst [vmem:[#allocation2 + $0x20] sm:$0xf] %v250
        %v253 = vld [vmem:[%s1] sm:$0xf]
        %v254 = vld [vmem:[#allocation2] sm:$0xf]
        %v255 = vld [vmem:[#allocation2 + $0x4] sm:$0xf]
        %v256 = vld [vmem:[#allocation2 + $0x8] sm:$0xf]
        %v257 = vld [vmem:[#allocation2 + $0xc] sm:$0xf]
        %v258 = vld [vmem:[#allocation2 + $0x10] sm:$0xf]
        %v259 = vld [vmem:[#allocation2 + $0x14] sm:$0xf]
        %v260 = vld [vmem:[#allocation2 + $0x18] sm:$0xf]
        %v261 = vld [vmem:[#allocation2 + $0x1c] sm:$0xf]
        %v262 = vld [vmem:[#allocation2 + $0x20] sm:$0xf]
        %v263 = vld [vmem:[%s2] sm:$0xff]
        %265 = vset.pattern.permute.xlu0 0
        %266 = vperm.xlu0 %265, %v263
        %v267 = vpop.permute.xlu0 %266
        %v278 = vunpack.c.l.b16 %v254
        %v279 = vunpack.c.l.b16 %v255
        %v280 = vunpack.c.l.b16 %v256
        %v281 = vunpack.c.l.b16 %v257
        %v282 = vunpack.c.l.b16 %v258
        %v283 = vunpack.c.l.b16 %v259
        %v284 = vunpack.c.l.b16 %v260
        %v285 = vunpack.c.l.b16 %v261
        %v286 = vunpack.c.l.b16 %v262
        %v287 = vpack.c.b16 %v279, %v278
        %v288 = vpack.c.b16 %v281, %v280
        %v289 = vpack.c.b16 %v283, %v282
        %v290 = vpack.c.b16 %v285, %v284
        %v291 = vpack.c.b16 %v286, %v286
        %vm296 = vcmask 588800
        %v298 = vsel %vm296, %v253, 0
        %vm300 = vcmask 1043456
        %v302 = vsel %vm300, %v291, 0
        %304 = vmatpush.bf16.msra.mxu0 0
        %305 = vmatpush.bf16.msra.mxu0 0
        %306 = vmatpush.bf16.msra.mxu0 0
        %307 = vmatpush.bf16.msra.mxu0 %v302
        %308 = vmatpush.bf16.msra.mxu0 %v290
        %309 = vmatpush.bf16.msra.mxu0 %v289
        %310 = vmatpush.bf16.msra.mxu0 %v288
        %311 = vmatpush.bf16.msra.mxu0 %v287
        %312 = vmatmul.bf16.gmra.mxu0 %v298
        %v313 = vpop.f32.mrf.mxu0
        %v314 = vadd.f32 %v267, %v313
        %v315 = vpop.f32.mrf.mxu0
        %316 = vdwg.mxu0
        %v317 = vmax.f32 %v314, 0.0
        %318 = vst [vmem:[%s188] sm:$0xff] %v317
        %s319 = sand.u32 %s96, 1
        %s320 = scalar_lea.sflag [#allocation5], %s319
        %s321 = sand.u32 %s96, 1
        %s322 = smul.addr %s321, 8
        %s323 = scalar_lea.vmem [#allocation6], %s322
        // Predicated region
        $region37: #{tpu_custom_call.1} parent=31 // pred_check
          %p324 = pneg %p106
        $region38: #{tpu_custom_call.1} parent=31 // pred_check_branch
          %326 = sbr.rel (%p324) target = $region40
        $region39: #{tpu_custom_call.1} parent=31 // pred_region
          %328 = vsyncadd %s320, 0
          %s329 = smul.addr %s20, 8
          %s330 = scalar_lea.hbm %s3, %s329
          %s332 = sshll.u32 %s323, 4
          %s333 = int_to_ptr.vmem [resolvable:$true] %s332
          %s334 = sshll.u32 %s330, 4
          %s335 = int_to_ptr.hbm [resolvable:$true] %s334
          %337 = dma.vmem_to_hbm [thread:$0]  %s333, 128, %s335, %s320
        $region40: #{tpu_custom_call.1} parent=31 // pred_fallthru
          _
      $region32: #{tpu_custom_call.1} parent=5 // pred_fallthru
        _
      %p338 = scmp.le.s32.totalorder 2, %s15
      // Predicated region
      $region41: #{tpu_custom_call.1} parent=5 // pred_check
        %p339 = pneg %p338
      $region42: #{tpu_custom_call.1} parent=5 // pred_check_branch
        %341 = sbr.rel (%p339) target = $region44
      $region43: #{tpu_custom_call.1} parent=5 // pred_region
        %s342 = ssub.s32 %s15, 2
        // Predicated region
        $region45: #{tpu_custom_call.1} parent=43 // pred_check
          %p343 = pneg %p112
        $region46: #{tpu_custom_call.1} parent=43 // pred_check_branch
          %345 = sbr.rel (%p343) target = $region48
        $region47: #{tpu_custom_call.1} parent=43 // pred_region
          %s346 = sand.u32 %s97, 1
          %s347 = scalar_lea.sflag [#allocation5], %s346
          %s348 = sand.u32 %s97, 1
          %s349 = smul.addr %s348, 8
          %s350 = scalar_lea.vmem [#allocation6], %s349
          %352 = dma.done %s347, 128
        $region48: #{tpu_custom_call.1} parent=43 // pred_fallthru
          _
      $region44: #{tpu_custom_call.1} parent=5 // pred_fallthru
        _
    $region6: #{tpu_custom_call.1} parent=1 // loop_footer
      %s19 = sadd.s32 1, %s15
    $region7: #{tpu_custom_call.1} parent=1 // loop_footer_branch
      %14 = sbr.rel target = $region3
    $region8: #{tpu_custom_call.1} parent=1 // loop_exit
      _
    %353 = vsyncpa [#allocation4], 1
    %s354 = scalar_lea.sflag [#allocation4], 1
    %355 = vsyncpa %s354, 1
    %356 = vsyncpa [#allocation5], 1
    %s357 = scalar_lea.sflag [#allocation5], 1
    %358 = vsyncpa %s357, 1

</llo_original>
